<compile_context>
chip_gen: v6e
topology: v6e:2x2x1
jax: 0.10.0
libtpu: 0.0.40
codegen_flags: <defaults>
</compile_context>

<pallas_src>
import functools

import jax
import jax.numpy as jnp
from jax import lax
from jax.experimental import pallas as pl
from jax.experimental.pallas import tpu as pltpu


_MAX_TK = 16384


def _vmem_capacity_bytes():
    """Per-TensorCore VMEM capacity; conservative fallback if the query fails."""
    try:
        info = pltpu.get_tpu_info()
        cap = int(getattr(info, "vmem_capacity_bytes"))
        if cap > 0:
            return cap
    except Exception:
        pass
    return 64 * 1024 * 1024        # v7x-class assumption (smallest VMEM)


def _vmem_params():
    """(working-set budget, vmem_limit clamp) chosen from the chip generation."""
    cap = _vmem_capacity_bytes()
    if cap >= 96 * 1024 * 1024:                       # v5e / v6e: 128 MiB per TC
        return 96 * 1024 * 1024, 100 * 1024 * 1024
    return 32 * 1024 * 1024, 48 * 1024 * 1024         # v7x-class: 64 MiB per TC


def _choose_tk(C, N, dtype_bytes, budget, n_buf):
    """Largest lane-aligned (multiple of 128) reduction tile fitting the budget."""
    overhead = 4 * C * C * 4 + (2 << 20)              # f32 Gram block(s) + margin
    avail = max(budget - overhead, n_buf * C * 128 * dtype_bytes)
    tk = avail // (n_buf * C * dtype_bytes)
    tk = max(128, (tk // 128) * 128)
    tk = min(tk, _MAX_TK)
    n_ceil = ((N + 127) // 128) * 128
    return int(min(tk, n_ceil))


def _vmem_limit(C, tk, dtype_bytes, n_buf, cast_bf16, limit_cap):
    limit = n_buf * C * tk * dtype_bytes + 4 * C * C * 4 + (4 << 20)
    if cast_bf16:
        limit += C * tk * 2                           # in-kernel bf16 operand temp
    return int(min(max(limit, 16 << 20), limit_cap))


def _feature_spec(C, tk, index_map, n_buf):
    """Features BlockSpec; request 3-deep buffering for small C when useful."""
    if n_buf > 2:
        try:
            return pl.BlockSpec((C, tk), index_map, pipeline_mode=pl.Buffered(n_buf))
        except (TypeError, AttributeError):
            pass
    return pl.BlockSpec((C, tk), index_map)


def _partial_gram_kernel(x_ref, g_ref, *, kb, tk, n_true, needs_mask, cast_bf16):
    """Per-core partial Gram.

    Grid = (core, reduction step).  g_ref is this core's (C, C) f32 accumulator
    (constant block index along the reduction axis -> VMEM-resident).  Columns
    past the true H*W (ragged tail / duplicated clamp block) are masked to zero
    before the MXU push, so no wrapper-side padding is ever needed.
    """
    c = pl.program_id(0)
    k = pl.program_id(1)

    @pl.when(k == 0)
    def _():
        g_ref[...] = jnp.zeros_like(g_ref)

    xb = x_ref[...]                                   # (C, tk), native dtype
    if cast_bf16:                                     # single-pass MXU, f32 accum
        xb = xb.astype(jnp.bfloat16)
    if needs_mask:
        valid = n_true - (c * kb + k) * tk            # may be <= 0 for dup blocks
        col = lax.broadcasted_iota(jnp.int32, (1, tk), 1)
        xb = jnp.where(col < valid, xb, jnp.zeros_like(xb))

    g_ref[...] += lax.dot_general(                    # contract last dims: A @ A^T
        xb, xb, (((1,), (1,)), ((), ())), preferred_element_type=jnp.float32)


def _partial_grams(features, n_true, *, tk=None, mxu_bf16=True):
    """features: (C, N) -> (2, C, C) f32 un-normalized partial Grams."""
    C, N = features.shape
    cast_bf16 = bool(mxu_bf16) and features.dtype == jnp.float32
    dtype_bytes = jnp.dtype(features.dtype).itemsize
    budget, limit_cap = _vmem_params()

    size_buf = 3 if C <= 128 else 2
    if tk is None:
        tk = _choose_tk(C, N, dtype_bytes, budget, size_buf)
    tk = int(tk)
    assert tk >= 128 and tk % 128 == 0, "tk must be a positive multiple of 128"

    n_blocks = pl.cdiv(N, tk)                         # no jnp.pad: ragged tail masked
    kb = pl.cdiv(n_blocks, 2)                         # reduction steps per core
    n_buf = 3 if (C <= 128 and kb >= 3) else 2
    needs_mask = (N % tk != 0) or (2 * kb != n_blocks)

    if 2 * kb == n_blocks:
        f_map = lambda c, k: (0, c * kb + k)
    else:
        last = n_blocks - 1                           # clamp the spare odd block
        f_map = lambda c, k: (0, jnp.minimum(c * kb + k, last))

    kernel = functools.partial(
        _partial_gram_kernel, kb=kb, tk=tk, n_true=int(n_true),
        needs_mask=needs_mask, cast_bf16=cast_bf16)

    return pl.pallas_call(
        kernel,
        out_shape=jax.ShapeDtypeStruct((2, C, C), jnp.float32),
        grid_spec=pltpu.PrefetchScalarGridSpec(
            num_scalar_prefetch=0,
            grid=(2, kb),                              # (core split, H*W stream)
            in_specs=[_feature_spec(C, tk, f_map, n_buf)],
            out_specs=pl.BlockSpec((None, C, C), lambda c, k: (c, 0, 0)),
        ),
        compiler_params=pltpu.CompilerParams(
            dimension_semantics=("parallel", "arbitrary"),
            vmem_limit_bytes=_vmem_limit(C, tk, dtype_bytes, n_buf, cast_bf16,
                                         limit_cap),
        ),
    )(features)


def gram_matrix_2d(features, n_true, *, tk=None, mxu_bf16=True):
    """features: (C, N) -> (C, C) f32 Gram, normalized by C * n_true."""
    C = features.shape[0]
    partials = _partial_grams(features, n_true, tk=tk, mxu_bf16=mxu_bf16)
    # Tiny (C, C) combine + precomputed-reciprocal scale in plain JAX.
    return (partials[0] + partials[1]) * (1.0 / float(C * n_true))


def gram_matrix(x_nchw, *, tk=None, mxu_bf16=True):
    """Pallas-backed equivalent of the PyTorch gram_matrix (batch must be 1)."""
    b, c, h, w = x_nchw.shape
    assert b == 1, "gram_matrix's view(c, h*w) requires batch == 1"
    features = x_nchw.reshape(c, h * w)               # keep native dtype
    return gram_matrix_2d(features, h * w, tk=tk, mxu_bf16=mxu_bf16)


class StyleLoss:
    """JAX/Pallas port of the PyTorch StyleLoss module."""

    def __init__(self, target_feature, *, tk=None, mxu_bf16=True):
        self.tk = tk
        self.mxu_bf16 = mxu_bf16
        self.target = gram_matrix(target_feature, tk=tk, mxu_bf16=mxu_bf16)
        self.loss = None

    def __call__(self, x_nchw):
        b, c, h, w = x_nchw.shape
        assert b == 1, "StyleLoss requires batch == 1 (PyTorch view(c, h*w))"
        G = gram_matrix(x_nchw, tk=self.tk, mxu_bf16=self.mxu_bf16)
        # Scalar MSE over (C, C) Grams: trivial; done in plain JAX per review.
        self.loss = jnp.mean((G - self.target) ** 2)
        return x_nchw                                  # forward returns input unchanged


def _reference_gram(x_nchw):
    b, c, h, w = x_nchw.shape
    f = x_nchw.reshape(c, h * w).astype(jnp.float32)
    return (f @ f.T) / (c * h * w)


def _reference_loss(x_nchw, target_gram):
    G = _reference_gram(x_nchw)
    return jnp.mean((G - target_gram) ** 2)


if __name__ == "__main__":
    key = jax.random.PRNGKey(0)
    k1, k2, k3, k4 = jax.random.split(key, 4)

    # Case 1: batch=1 (required by the module), C=16, H=W=16; default bf16 MXU path.
    B, C, H, W = 1, 16, 16, 16
    target_feature = jax.random.normal(k1, (B, C, H, W), jnp.float32)
    x = jax.random.normal(k2, (B, C, H, W), jnp.float32)

    module = StyleLoss(target_feature)
    out = jax.block_until_ready(module(x))
    loss = jax.block_until_ready(module.loss)

    assert out.shape == x.shape and jnp.allclose(out, x)
    assert jnp.allclose(module.target, _reference_gram(target_feature),
                        rtol=2e-2, atol=1e-3)
    ref_loss = _reference_loss(x, _reference_gram(target_feature))
    assert jnp.allclose(loss, ref_loss, rtol=5e-2, atol=1e-6), (loss, ref_loss)

    # Case 2: ragged H*W (N=800), forced tk=128 -> 7 blocks: exercises the
    # in-kernel tail mask, multi-step accumulation, the odd-block clamp/mask path
    # of the 2-core split, and the Buffered(3) small-C pipeline.
    H2, W2 = 20, 40
    tf2 = jax.random.normal(k3, (B, C, H2, W2), jnp.float32)
    x2 = jax.random.normal(k4, (B, C, H2, W2), jnp.float32)
    m2 = StyleLoss(tf2, tk=128)
    out2 = jax.block_until_ready(m2(x2))
    loss2 = jax.block_until_ready(m2.loss)
    assert out2.shape == x2.shape and jnp.allclose(out2, x2)
    assert jnp.allclose(m2.target, _reference_gram(tf2), rtol=2e-2, atol=1e-3)
    ref_loss2 = _reference_loss(x2, _reference_gram(tf2))
    assert jnp.allclose(loss2, ref_loss2, rtol=5e-2, atol=1e-6), (loss2, ref_loss2)

    # Case 3: high-precision path (no in-kernel bf16 cast), tight tolerance.
    m3 = StyleLoss(target_feature, mxu_bf16=False)
    out3 = jax.block_until_ready(m3(x))
    loss3 = jax.block_until_ready(m3.loss)
    assert out3.shape == x.shape and jnp.allclose(out3, x)
    assert jnp.allclose(m3.target, _reference_gram(target_feature),
                        rtol=1e-5, atol=1e-6)
    assert jnp.allclose(loss3, ref_loss, rtol=1e-5, atol=1e-6), (loss3, ref_loss)

    print("KERNEL_OK")
</pallas_src>

<mosaic_0001>
module attributes {stable_mosaic.version = 11 : i64} {
  func.func @_partial_gram_kernel(%arg0: i32, %arg1: i32, %arg2: memref<16x256xf32, #tpu.memory_space<vmem>>, %arg3: memref<1x16x16xf32, #tpu.memory_space<vmem>>) attributes {dimension_semantics = [#tpu.dimension_semantics<parallel>, #tpu.dimension_semantics<arbitrary>], iteration_bounds = array<i64: 2, 1>, scalar_prefetch = 0 : i64, scratch_operands = 0 : i64, tpu.core_type = #tpu.core_type<tc>, window_params = [{transform_indices = @transform_0, window_bounds = array<i64: 16, 256>}, {transform_indices = @transform_1, window_bounds = array<i64: 1, 16, 16>}]} {
    %c0_i32 = arith.constant 0 : i32
    %0 = arith.cmpi eq, %arg1, %c0_i32 : i32
    %1 = arith.extui %0 : i1 to i32
    %c0_i32_0 = arith.constant 0 : i32
    %2 = arith.cmpi ne, %1, %c0_i32_0 : i32
    scf.if %2 {
      %cst_10 = arith.constant 0.000000e+00 : f32
      %23 = vector.broadcast %cst_10 : f32 to vector<16x16xf32>
      %c0_11 = arith.constant 0 : index
      %c0_12 = arith.constant 0 : index
      %c0_13 = arith.constant 0 : index
      %24 = vector.load %arg3[%c0_11, %c0_12, %c0_13] : memref<1x16x16xf32, #tpu.memory_space<vmem>>, vector<1x16x16xf32>
      %25 = vector.shape_cast %24 : vector<1x16x16xf32> to vector<16x16xf32>
      %26 = vector.shape_cast %23 : vector<16x16xf32> to vector<1x16x16xf32>
      tpu.vector_store %arg3[%c0_11, %c0_12, %c0_13], %26 {strides = array<i32>} : memref<1x16x16xf32, #tpu.memory_space<vmem>>, vector<1x16x16xf32>,
    } else {
    }
    %c0 = arith.constant 0 : index
    %c0_1 = arith.constant 0 : index
    %3 = vector.load %arg2[%c0, %c0_1] : memref<16x256xf32, #tpu.memory_space<vmem>>, vector<16x256xf32>
    %4 = arith.truncf %3 : vector<16x256xf32> to vector<16x256xbf16>
    %c1_i32 = arith.constant 1 : i32
    %5 = arith.muli %arg0, %c1_i32 : i32
    %6 = arith.addi %5, %arg1 : i32
    %c256_i32 = arith.constant 256 : i32
    %7 = arith.muli %6, %c256_i32 : i32
    %c256_i32_2 = arith.constant 256 : i32
    %8 = arith.subi %c256_i32_2, %7 : i32
    %9 = tpu.iota {dimensions = array<i32: 1>} : vector<1x256xi32>
    %10 = vector.broadcast %8 : i32 to vector<1x256xi32>
    %11 = arith.cmpi slt, %9, %10 : vector<1x256xi32>
    %cst = arith.constant 0.000000e+00 : bf16
    %12 = vector.broadcast %cst : bf16 to vector<16x256xbf16>
    %13 = vector.shape_cast %11 : vector<1x256xi1> to vector<1x256xi1>
    %14 = vector.broadcast %13 : vector<1x256xi1> to vector<16x256xi1>
    %15 = arith.select %14, %4, %12 : vector<16x256xi1>, vector<16x256xbf16>
    %c0_3 = arith.constant 0 : index
    %c0_4 = arith.constant 0 : index
    %c0_5 = arith.constant 0 : index
    %16 = vector.load %arg3[%c0_3, %c0_4, %c0_5] : memref<1x16x16xf32, #tpu.memory_space<vmem>>, vector<1x16x16xf32>
    %17 = vector.shape_cast %16 : vector<1x16x16xf32> to vector<16x16xf32>
    %cst_6 = arith.constant dense<0.000000e+00> : vector<16x16xf32>
    %18 = tpu.matmul %15, %15, %cst_6 {dimension_numbers = #tpu.dot_dimension_numbers<[1], [1], [0], [0], [0, 0, 1, 0], [], []>} : vector<16x256xbf16>, vector<16x256xbf16>, vector<16x16xf32> -> vector<16x16xf32>
    %19 = arith.addf %17, %18 : vector<16x16xf32>
    %c0_7 = arith.constant 0 : index
    %c0_8 = arith.constant 0 : index
    %c0_9 = arith.constant 0 : index
    %20 = vector.load %arg3[%c0_7, %c0_8, %c0_9] : memref<1x16x16xf32, #tpu.memory_space<vmem>>, vector<1x16x16xf32>
    %21 = vector.shape_cast %20 : vector<1x16x16xf32> to vector<16x16xf32>
    %22 = vector.shape_cast %19 : vector<16x16xf32> to vector<1x16x16xf32>
    tpu.vector_store %arg3[%c0_7, %c0_8, %c0_9], %22 {strides = array<i32>} : memref<1x16x16xf32, #tpu.memory_space<vmem>>, vector<1x16x16xf32>,
    return
  }
  func.func @transform_0(%arg0: i32, %arg1: i32) -> (i32, i32) {
    %c1_i32 = arith.constant 1 : i32
    %0 = arith.muli %arg0, %c1_i32 : i32
    %1 = arith.addi %0, %arg1 : i32
    %c0_i32 = arith.constant 0 : i32
    %2 = arith.minsi %1, %c0_i32 : i32
    %c0_i32_0 = arith.constant 0 : i32
    %c0_i32_1 = arith.constant 0 : i32
    return %c0_i32_0, %2 : i32, i32
  }
  func.func @transform_1(%arg0: i32, %arg1: i32) -> (i32, i32, i32) {
    %c0_i32 = arith.constant 0 : i32
    %c0_i32_0 = arith.constant 0 : i32
    %c0_i32_1 = arith.constant 0 : i32
    return %arg0, %c0_i32, %c0_i32_0 : i32, i32, i32
  }
}

</mosaic_0001>

<llo_original>
// kernel: tpu_custom_call.1
$region0: #{tpu_custom_call.1}
  #allocation0 [shape = 'u32[]', space=smem, size = 0x4, offset = 0x4, fixed_abs, tag = 'smem constant byte address 0x4 - core index']
  #allocation1 [shape = 'u32[144,128]{1,0:T(1,128)}', space=vmem, size = 0x12000, scoped, tag = 'internal scratch']
  %s0 = inlined_call_operand.hbm [shape: f32[16,256], index: 0, kind: input, shape index: {}]
  %s1 = inlined_call_operand.hbm [shape: f32[2,16,16], index: 1, kind: output, shape index: {}]
  %s2 = sld [smem:[#allocation0]]
  $region45: #{tpu_custom_call.1} parent=0
    _
  %s4 = ssub.s32 1, %s2
  %s5 = scalar_select 0, %s4, %s2
  $region1: #{tpu_custom_call.1} parent=0
    #allocation2 [shape = 'u8[32768]{0}', space=vmem, size = 0x8000, scoped, tag = 'input window, operand 0']
    #allocation3 [shape = 's32[2]{0}', space=sflag, size = 0x8, scoped, tag = 'scoped memory for tpu_custom_call.1']
    #allocation4 [shape = 's32[2]{0}', space=sflag, size = 0x8, scoped, tag = 'scoped memory for tpu_custom_call.1']
    #allocation5 [shape = 'u8[16384]{0}', space=vmem, size = 0x4000, scoped, tag = 'output window, operand 0']
    %6 = vsyncpa [#allocation3], 0
    %s7 = scalar_lea.sflag [#allocation3], 1
    %8 = vsyncpa %s7, 0
    %9 = vsyncpa [#allocation4], 0
    %s10 = scalar_lea.sflag [#allocation4], 1
    %11 = vsyncpa %s10, 0
    loop: start=0, step=1, limit=4
    $region2: #{tpu_custom_call.1} parent=1 // loop_pre_header
      _
    $region3: #{tpu_custom_call.1} parent=1 // loop_header
      %s13 = sphi 0, %s17
      %p14 = scmp.ge.s32.totalorder %s13, 4
      %s20 = sphi 0, %s32
      %s21 = sphi 0, %s28
      %s22 = sphi 0, %s20
      %s23 = sphi 0, %s21
      %s24 = sphi 0, %s22
      %s25 = sphi 0, %s23
      %s41 = sphi 0, %s43
      %s44 = sphi 0, %s41
      %s45 = sphi 0, %s44
      %s61 = sphi 0, %s45
      %s67 = sphi 0, %s69
      %s70 = sphi 0, %s67
      %s71 = sphi 0, %s70
      %s87 = sphi 0, %s71
    $region4: #{tpu_custom_call.1} parent=1 // loop_header_branch
      %16 = sbr.rel (%p14) target = $region8
    $region5: #{tpu_custom_call.1} parent=1 // loop_body
      %s18 = ssub.s32 %s13, 1
      %s19 = ssub.s32 %s13, 2
      %s26 = sadd.s32 1, %s21
      %p27 = scmp.ge.s32.totalorder %s26, 1
      %s28 = scalar_select %p27, 0, %s26
      %s29 = sadd.s32 1, %s20
      %s30 = scalar_select %p27, %s29, %s20
      %p31 = scmp.ge.s32.totalorder %s30, 2
      %s32 = scalar_select %p31, 0, %s30
      %s33 = sadd.s32 %s20, %s21
      %p34 = scmp.lt.s32.totalorder %s33, 0
      %s35 = scalar_select %p34, %s33, 0
      %s36 = sadd.s32 %s32, %s28
      %p37 = scmp.lt.s32.totalorder %s36, 0
      %s38 = scalar_select %p37, %s36, 0
      %s39 = ssub.s32 %s35, %s38
      %p40 = scmp.eq.s32.totalorder %s39, 0
      %s42 = sadd.s32 %s41, 1
      %s43 = scalar_select %p40, %s41, %s42
      %p46 = pneg %p40
      %p47 = scmp.eq.s32.totalorder %s13, 1
      %p48 = por %p46, %p47
      %p49 = scmp.ne.s32.totalorder %s41, %s44
      %p50 = scmp.eq.s32.totalorder %s13, 0
      %p51 = por %p49, %p50
      %p52 = scmp.ne.s32.totalorder %s41, %s44
      %p53 = scmp.eq.s32.totalorder %s18, 1
      %p54 = por %p52, %p53
      %p55 = scmp.ne.s32.totalorder %s44, %s45
      %p56 = scmp.eq.s32.totalorder %s18, 0
      %p57 = por %p55, %p56
      %p58 = scmp.ne.s32.totalorder %s44, %s45
      %p59 = scmp.eq.s32.totalorder %s19, 1
      %p60 = por %p58, %p59
      %p62 = scmp.ne.s32.totalorder %s45, %s61
      %p63 = scmp.eq.s32.totalorder %s19, 0
      %p64 = por %p62, %p63
      %s65 = ssub.s32 %s20, %s32
      %p66 = scmp.eq.s32.totalorder %s65, 0
      %s68 = sadd.s32 %s67, 1
      %s69 = scalar_select %p66, %s67, %s68
      %p72 = pneg %p66
      %p73 = scmp.eq.s32.totalorder %s13, 1
      %p74 = por %p72, %p73
      %p75 = scmp.ne.s32.totalorder %s67, %s70
      %p76 = scmp.eq.s32.totalorder %s13, 0
      %p77 = por %p75, %p76
      %p78 = scmp.ne.s32.totalorder %s67, %s70
      %p79 = scmp.eq.s32.totalorder %s18, 1
      %p80 = por %p78, %p79
      %p81 = scmp.ne.s32.totalorder %s70, %s71
      %p82 = scmp.eq.s32.totalorder %s18, 0
      %p83 = por %p81, %p82
      %p84 = scmp.ne.s32.totalorder %s70, %s71
      %p85 = scmp.eq.s32.totalorder %s19, 1
      %p86 = por %p84, %p85
      %p88 = scmp.ne.s32.totalorder %s71, %s87
      %p89 = scmp.eq.s32.totalorder %s19, 0
      %p90 = por %p88, %p89
      %p91 = scmp.le.s32.totalorder 1, %s13
      %p92 = scmp.lt.s32.totalorder %s13, 3
      %p93 = pnand %p91, %p92
      %p94 = pneg %p93
      // Predicated region
      $region9: #{tpu_custom_call.1} parent=5 // pred_check
        _
      $region10: #{tpu_custom_call.1} parent=5 // pred_check_branch
        %96 = sbr.rel (%p93) target = $region12
      $region11: #{tpu_custom_call.1} parent=5 // pred_region
        %s97 = ssub.s32 %s13, 1
      $region12: #{tpu_custom_call.1} parent=5 // pred_fallthru
        _
      %p98 = scmp.lt.s32.totalorder %s13, 2
      // Predicated region
      $region13: #{tpu_custom_call.1} parent=5 // pred_check
        %p99 = pneg %p98
      $region14: #{tpu_custom_call.1} parent=5 // pred_check_branch
        %101 = sbr.rel (%p99) target = $region16
      $region15: #{tpu_custom_call.1} parent=5 // pred_region
        // Predicated region
        $region17: #{tpu_custom_call.1} parent=15 // pred_check
          %p102 = pneg %p51
        $region18: #{tpu_custom_call.1} parent=15 // pred_check_branch
          %104 = sbr.rel (%p102) target = $region20
        $region19: #{tpu_custom_call.1} parent=15 // pred_region
          %s105 = sand.u32 %s41, 1
          %s106 = scalar_lea.sflag [#allocation3], %s105
          %s107 = sand.u32 %s41, 1
          %s108 = smul.addr %s107, 32
          %s109 = scalar_lea.vmem [#allocation2], %s108
          %s110 = sadd.s32 %s20, %s21
          %p111 = scmp.lt.s32.totalorder %s110, 0
          %s112 = scalar_select %p111, %s110, 0
          %s113 = smul.u32 2, %s112
          %s115 = ssub.s32 512, 512
          %116 = vsyncadd %s106, %s115
          %s117 = smul.addr %s113, 128
          %s118 = scalar_lea.hbm %s0, %s117
          %s119 = sshll.u32 %s109, 4
          %s120 = int_to_ptr.vmem [resolvable:$true] %s119
          %125 = dma.hbm_to_vmem [thread:$0]  %s118, 512, %s120, %s106, 256, 256, 16
        $region20: #{tpu_custom_call.1} parent=15 // pred_fallthru
          _
      $region16: #{tpu_custom_call.1} parent=5 // pred_fallthru
        _
      %p126 = scmp.le.s32.totalorder 1, %s13
      %p127 = scmp.lt.s32.totalorder %s13, 3
      %p128 = pnand %p126, %p127
      %p129 = pneg %p128
      // Predicated region
      $region21: #{tpu_custom_call.1} parent=5 // pred_check
        _
      $region22: #{tpu_custom_call.1} parent=5 // pred_check_branch
        %131 = sbr.rel (%p128) target = $region24
      $region23: #{tpu_custom_call.1} parent=5 // pred_region
        %s132 = ssub.s32 %s13, 1
        %s133 = sand.u32 %s44, 1
        %s134 = scalar_lea.sflag [#allocation3], %s133
        %s135 = sand.u32 %s44, 1
        %s136 = smul.addr %s135, 32
        %s137 = scalar_lea.vmem [#allocation2], %s136
        // Predicated region
        $region25: #{tpu_custom_call.1} parent=23 // pred_check
          %p138 = pneg %p57
        $region26: #{tpu_custom_call.1} parent=23 // pred_check_branch
          %140 = sbr.rel (%p138) target = $region28
        $region27: #{tpu_custom_call.1} parent=23 // pred_region
          %141 = dma.done %s134, 512
        $region28: #{tpu_custom_call.1} parent=23 // pred_fallthru
          _
        %s142 = sand.u32 %s44, 1
        %s143 = scalar_lea.sflag [#allocation3], %s142
        %s144 = sand.u32 %s44, 1
        %s145 = smul.addr %s144, 32
        %s146 = scalar_lea.vmem [#allocation2], %s145
        %p147 = pneg %p57
        %p148 = pneg %p54
        %p149 = pneg %p83
        %p150 = pneg %p80
        %s151 = sand.u32 %s70, 1
        %s152 = scalar_lea.sflag [#allocation4], %s151
        %s153 = sand.u32 %s70, 1
        %s154 = smul.addr %s153, 16
        %s155 = scalar_lea.vmem [#allocation5], %s154
        %s156 = sadd.s32 %s22, %s23
        %p157 = scmp.lt.s32.totalorder %s156, 0
        %s158 = scalar_select %p157, %s156, 0
        %s159 = smul.u32 2, %s158
        %p163 = scmp.eq.s32.totalorder %s23, 0
        // Predicated region
        $region29: #{tpu_custom_call.1} parent=23 // pred_check
          %p164 = pneg %p163
        $region30: #{tpu_custom_call.1} parent=23 // pred_check_branch
          %166 = sbr.rel (%p164) target = $region32
        $region31: #{tpu_custom_call.1} parent=23 // pred_region
          %vm167 = vcmask 130048
          %168 = vst.msk [vmem:[%s155] sm:$0xff] %vm167, 0.0
          %169 = vst.msk [vmem:[%s155 + $0x8] sm:$0xff] %vm167, 0.0
        $region32: #{tpu_custom_call.1} parent=23 // pred_fallthru
          _
        %v170 = vld [vmem:[%s137] sm:$0xff]
        %v171 = vld [vmem:[%s137 + $0x8] sm:$0xff]
        %v172 = vld [vmem:[%s137 + $0x10] sm:$0xff]
        %v173 = vld [vmem:[%s137 + $0x18] sm:$0xff]
        %v174 = vpack.c.bf16 %v172, %v170
        %v175 = vpack.c.bf16 %v173, %v171
        %s176 = sadd.s32 %s22, %s23
        %s177 = smul.u32 %s176, 256
        %s178 = ssub.s32 256, %s177
        %v179 = vlaneseq
        %v180 = vand.u32 %v179, 127
        %v181 = vadd.s32 %v180, 128
        %v182 = vstv %s178
        %vm183 = vcmp.lt.s32.totalorder %v180, %v182
        %vm184 = vcmp.lt.s32.totalorder %v181, %v182
        %v185 = vsel %vm183, 1, 0
        %v186 = vsel %vm184, 1, 0
        %vm187 = vcmp.eq.s32.totalorder %v185, 1
        %vm188 = vcmp.eq.s32.totalorder %v186, 1
        %vm189 = vmpackc.low %vm188, %vm187
        %v190 = vsel %vm189, 65537, 0
        %v191 = vlaneseq
        %v192 = vshrl.u32 %v191, 7
        %v193 = vsub.s32 0, %v192
        %v194 = vrot.slane %v190, %v193
        %v195 = vlaneseq
        %v196 = vshrl.u32 %v195, 7
        %v197 = vsub.s32 4, %v196
        %v198 = vrot.slane %v190, %v197
        %vm199 = vcmp.ne.s16.totalorder %v194, 0
        %vm200 = vcmp.ne.s16.totalorder %v198, 0
        %v201 = vsel %vm199, %v174, 0
        %v202 = vsel %vm200, %v175, 0
        %v203 = vld [vmem:[%s155] sm:$0xff]
        %v204 = vld [vmem:[%s155 + $0x8] sm:$0xff]
        %205 = vmatprep.subr.bf16.mxu0 0
        %206 = vmatpush1.bf16.xpose.msra.mxu0 0
        %207 = vmatprep.subr.bf16.mxu0 0
        %208 = vmatpush1.bf16.xpose.msra.mxu0 0
        %209 = vmatprep.subr.bf16.mxu0 0
        %210 = vmatpush1.bf16.xpose.msra.mxu0 0
        %211 = vmatprep.subr.bf16.mxu0 0
        %212 = vmatpush1.bf16.xpose.msra.mxu0 0
        %213 = vmatprep.subr.bf16.mxu0 0
        %214 = vmatpush1.bf16.xpose.msra.mxu0 0
        %215 = vmatprep.subr.bf16.mxu0 0
        %216 = vmatpush1.bf16.xpose.msra.mxu0 0
        %217 = vmatprep.subr.bf16.mxu0 0
        %218 = vmatpush1.bf16.xpose.msra.mxu0 0
        %219 = vmatprep.subr.bf16.mxu0 %v202
        %220 = vmatpush1.bf16.xpose.msra.mxu0 %v201
        %221 = vmatprep.subr.bf16.mxu0 0
        %222 = vmatpush2.bf16.xpose.msra.mxu0 0
        %223 = vmatprep.subr.bf16.mxu0 0
        %224 = vmatpush2.bf16.xpose.msra.mxu0 0
        %225 = vmatprep.subr.bf16.mxu0 0
        %226 = vmatpush2.bf16.xpose.msra.mxu0 0
        %227 = vmatprep.subr.bf16.mxu0 0
        %228 = vmatpush2.bf16.xpose.msra.mxu0 0
        %229 = vmatprep.subr.bf16.mxu0 0
        %230 = vmatpush2.bf16.xpose.msra.mxu0 0
        %231 = vmatprep.subr.bf16.mxu0 0
        %232 = vmatpush2.bf16.xpose.msra.mxu0 0
        %233 = vmatprep.subr.bf16.mxu0 0
        %234 = vmatpush2.bf16.xpose.msra.mxu0 0
        %235 = vmatprep.subr.bf16.mxu0 0
        %236 = vmatpush2.bf16.xpose.msra.mxu0 0
        %237 = vmatprep.mubr.bf16.mxu0 %v202
        %238 = vmatmul.mubr.bf16.gmra.mxu0 %v201
        %v239 = vpop.f32.mrf.mxu0
        %v240 = vadd.f32 0.0, %v239
        %v241 = vpop.f32.mrf.mxu0
        %v242 = vpop.f32.mrf.mxu0
        %v243 = vadd.f32 0.0, %v242
        %v244 = vpop.f32.mrf.mxu0
        %245 = vdwg.mxu0
        %v246 = vadd.f32 %v203, %v240
        %v247 = vadd.f32 %v204, %v243
        %vm248 = vcmask 130048
        %249 = vst.msk [vmem:[%s155] sm:$0xff] %vm248, %v246
        %250 = vst.msk [vmem:[%s155 + $0x8] sm:$0xff] %vm248, %v247
        %s251 = sand.u32 %s70, 1
        %s252 = scalar_lea.sflag [#allocation4], %s251
        %s253 = sand.u32 %s70, 1
        %s254 = smul.addr %s253, 16
        %s255 = scalar_lea.vmem [#allocation5], %s254
        // Predicated region
        $region33: #{tpu_custom_call.1} parent=23 // pred_check
          %p256 = pneg %p80
        $region34: #{tpu_custom_call.1} parent=23 // pred_check_branch
          %258 = sbr.rel (%p256) target = $region36
        $region35: #{tpu_custom_call.1} parent=23 // pred_region
          %s260 = ssub.s32 256, 256
          %261 = vsyncadd %s252, %s260
          %s262 = smul.addr %s22, 2
          %s263 = smul.addr %s262, 128
          %s264 = scalar_lea.hbm %s1, %s263
          %s265 = sshll.u32 %s255, 4
          %s266 = int_to_ptr.vmem [resolvable:$true] %s265
          %271 = dma.vmem_to_hbm [thread:$0]  %s266, 256, %s264, %s252, 128, 128, 8
        $region36: #{tpu_custom_call.1} parent=23 // pred_fallthru
          _
      $region24: #{tpu_custom_call.1} parent=5 // pred_fallthru
        _
      %p272 = scmp.le.s32.totalorder 2, %s13
      // Predicated region
      $region37: #{tpu_custom_call.1} parent=5 // pred_check
        %p273 = pneg %p272
      $region38: #{tpu_custom_call.1} parent=5 // pred_check_branch
        %275 = sbr.rel (%p273) target = $region40
      $region39: #{tpu_custom_call.1} parent=5 // pred_region
        %s276 = ssub.s32 %s13, 2
        // Predicated region
        $region41: #{tpu_custom_call.1} parent=39 // pred_check
          %p277 = pneg %p86
        $region42: #{tpu_custom_call.1} parent=39 // pred_check_branch
          %279 = sbr.rel (%p277) target = $region44
        $region43: #{tpu_custom_call.1} parent=39 // pred_region
          %s280 = sand.u32 %s71, 1
          %s281 = scalar_lea.sflag [#allocation4], %s280
          %s282 = sand.u32 %s71, 1
          %s283 = smul.addr %s282, 16
          %s284 = scalar_lea.vmem [#allocation5], %s283
          %285 = dma.done %s281, 256
        $region44: #{tpu_custom_call.1} parent=39 // pred_fallthru
          _
      $region40: #{tpu_custom_call.1} parent=5 // pred_fallthru
        _
    $region6: #{tpu_custom_call.1} parent=1 // loop_footer
      %s17 = sadd.s32 1, %s13
    $region7: #{tpu_custom_call.1} parent=1 // loop_footer_branch
      %12 = sbr.rel target = $region3
    $region8: #{tpu_custom_call.1} parent=1 // loop_exit
      _
    %286 = vsyncpa [#allocation3], 1
    %s287 = scalar_lea.sflag [#allocation3], 1
    %288 = vsyncpa %s287, 1
    %289 = vsyncpa [#allocation4], 1
    %s290 = scalar_lea.sflag [#allocation4], 1
    %291 = vsyncpa %s290, 1

</llo_original>
